<compile_context>
chip_gen: v5e
topology: v5e:2x2
jax: 0.10.0
libtpu: 0.0.40
codegen_flags: <defaults>
</compile_context>

<pallas_src>
import jax
import jax.numpy as jnp
from jax.experimental import pallas as pl
from jax.experimental.pallas import tpu as pltpu  # noqa: F401  (kept for TPU-specific tuning hooks)


def _round_up(x, m):
    return ((x + m - 1) // m) * m


# ---------------------------------------------------------------------------
# Pallas kernels
# ---------------------------------------------------------------------------
def _ce_head_kernel(cls_ref, w_ref, b_ref, pred_ref):
    # cls_ref: [B, H], w_ref: [H, Cp], b_ref: [1, Cp]  ->  pred_ref: [B, Cp]
    # Cp is a multiple of 128 so the output store is lane-dense (unmasked vst).
    # TODO(synk): nn.Dropout(0.5) is identity in eval mode; training-mode mask not applied here.
    pred_ref[...] = (
        jnp.dot(cls_ref[...], w_ref[...], preferred_element_type=jnp.float32)
        + b_ref[...]
    )


def _label_head_kernel(cls_ref, lab_ref, pred_ref):
    # cls_ref: [B, 1, H], lab_ref: [B, C, H]  ->  pred_ref: [B, 1, C]
    # Batched matmul routed to the MXU (einsum('bd,bcd->bc') with a unit q dim),
    # instead of a VPU broadcast-multiply + XLU cross-lane reduction over H.
    pred_ref[...] = jnp.einsum(
        "bqd,bkd->bqk",
        cls_ref[...],
        lab_ref[...],
        preferred_element_type=jnp.float32,
    )


# ---------------------------------------------------------------------------
# Wrapper
# ---------------------------------------------------------------------------
def transformer_head(hiddens, weight, bias, num_classes, method):
    """hiddens: [B, S, H] float32, weight: [H, C], bias: [C]."""
    B, S, H = hiddens.shape
    C = num_classes

    # Pure slices of hiddens: done in the wrapper so the kernels never see the
    # full [B, S, H] tensor (HBM->VMEM traffic drops by ~S/(C+1)x and the kernel
    # fits VMEM on v7x at production sizes).
    cls_feats = hiddens[:, 0, :]  # [B, H]

    if method in ("ce", "scl"):
        # Pad the class axis to a lane-dense multiple of 128 (zero-padded weight/bias),
        # crop the prediction back after the kernel.
        Cp = _round_up(C, 128)
        w_pad = jnp.zeros((H, Cp), weight.dtype).at[:, :C].set(weight)
        b_pad = jnp.zeros((1, Cp), bias.dtype).at[0, :C].set(bias)

        pred_pad = pl.pallas_call(
            _ce_head_kernel,
            out_shape=jax.ShapeDtypeStruct((B, Cp), jnp.float32),
        )(cls_feats, w_pad, b_pad)
        predicts = pred_pad[:, :C]
        return {"predicts": predicts, "cls_feats": cls_feats, "label_feats": None}
    else:
        assert S >= C + 1, (
            f"sequence length {S} too short for num_classes={C} (need S >= C+1)"
        )
        label_feats = hiddens[:, 1 : C + 1, :]  # [B, C, H]
        cls3 = hiddens[:, 0:1, :]               # [B, 1, H]

        pred3 = pl.pallas_call(
            _label_head_kernel,
            out_shape=jax.ShapeDtypeStruct((B, 1, C), jnp.float32),
        )(cls3, label_feats)
        predicts = pred3[:, 0, :]
        return {"predicts": predicts, "cls_feats": cls_feats, "label_feats": label_feats}


# ---------------------------------------------------------------------------
# Main
# ---------------------------------------------------------------------------
if __name__ == "__main__":
    B, S, H, C = 2, 8, 32, 4  # batch, seq, hidden_size, num_classes

    key = jax.random.PRNGKey(0)
    k_h, k_w, k_b = jax.random.split(key, 3)

    hiddens = jax.random.normal(k_h, (B, S, H), dtype=jnp.float32)
    # deterministic nn.Linear(H, C)-shaped params
    bound = 1.0 / (H ** 0.5)
    weight = jax.random.uniform(k_w, (H, C), jnp.float32, -bound, bound)
    bias = jax.random.uniform(k_b, (C,), jnp.float32, -bound, bound)

    # --- method = 'ce' branch ---
    out_ce = transformer_head(hiddens, weight, bias, C, method="ce")
    jax.block_until_ready(out_ce["predicts"])

    # --- other-method branch (einsum with label_feats) ---
    out_lab = transformer_head(hiddens, weight, bias, C, method="other")
    jax.block_until_ready(out_lab["predicts"])

    # reference checks (plain JAX)
    cls_ref = hiddens[:, 0, :]
    pred_ce_ref = cls_ref @ weight + bias
    lab_ref = hiddens[:, 1 : C + 1, :]
    pred_lab_ref = jnp.einsum("bd,bcd->bc", cls_ref, lab_ref)

    assert jnp.allclose(out_ce["predicts"], pred_ce_ref, atol=1e-5)
    assert jnp.allclose(out_ce["cls_feats"], cls_ref, atol=1e-6)
    assert out_ce["label_feats"] is None
    assert jnp.allclose(out_lab["predicts"], pred_lab_ref, atol=1e-5)
    assert jnp.allclose(out_lab["cls_feats"], cls_ref, atol=1e-6)
    assert jnp.allclose(out_lab["label_feats"], lab_ref, atol=1e-6)

    print("KERNEL_OK")
</pallas_src>

<mosaic_0001>
module attributes {stable_mosaic.version = 11 : i64} {
  func.func @_ce_head_kernel(%arg0: memref<2x32xf32, #tpu.memory_space<vmem>>, %arg1: memref<32x128xf32, #tpu.memory_space<vmem>>, %arg2: memref<1x128xf32, #tpu.memory_space<vmem>>, %arg3: memref<2x128xf32, #tpu.memory_space<vmem>>) attributes {dimension_semantics = [], scalar_prefetch = 0 : i64, scratch_operands = 0 : i64, tpu.core_type = #tpu.core_type<tc>} {
    %c0 = arith.constant 0 : index
    %c0_0 = arith.constant 0 : index
    %0 = vector.load %arg0[%c0, %c0_0] : memref<2x32xf32, #tpu.memory_space<vmem>>, vector<2x32xf32>
    %c0_1 = arith.constant 0 : index
    %c0_2 = arith.constant 0 : index
    %1 = vector.load %arg1[%c0_1, %c0_2] : memref<32x128xf32, #tpu.memory_space<vmem>>, vector<32x128xf32>
    %cst = arith.constant dense<0.000000e+00> : vector<2x128xf32>
    %2 = tpu.matmul %0, %1, %cst {dimension_numbers = #tpu.dot_dimension_numbers<[1], [0], [0], [1], [0, 0, 1, 1], [], []>} : vector<2x32xf32>, vector<32x128xf32>, vector<2x128xf32> -> vector<2x128xf32>
    %c0_3 = arith.constant 0 : index
    %c0_4 = arith.constant 0 : index
    %3 = vector.load %arg2[%c0_3, %c0_4] : memref<1x128xf32, #tpu.memory_space<vmem>>, vector<1x128xf32>
    %4 = vector.broadcast %3 : vector<1x128xf32> to vector<2x128xf32>
    %5 = arith.addf %2, %4 : vector<2x128xf32>
    %c0_5 = arith.constant 0 : index
    %c0_6 = arith.constant 0 : index
    %6 = vector.load %arg3[%c0_5, %c0_6] : memref<2x128xf32, #tpu.memory_space<vmem>>, vector<2x128xf32>
    tpu.vector_store %arg3[%c0_5, %c0_6], %5 {strides = array<i32>} : memref<2x128xf32, #tpu.memory_space<vmem>>, vector<2x128xf32>,
    return
  }
}

</mosaic_0001>

<llo_original>
// kernel: tpu_custom_call.1
$region0: #{tpu_custom_call.1}
  #allocation0 [shape = 'u32[]', space=smem, size = 0x4, offset = 0x4, fixed_abs, tag = 'smem constant byte address 0x4 - core index']
  #allocation1 [shape = 'u32[72,128]{1,0:T(1,128)}', space=vmem, size = 0x9000, scoped, tag = 'internal scratch']
  %s0 = inlined_call_operand.hbm [shape: f32[2,32], index: 0, kind: input, shape index: {}]
  %s1 = inlined_call_operand.hbm [shape: f32[32,128], index: 1, kind: input, shape index: {}]
  %s2 = inlined_call_operand.vmem [shape: f32[1,128], index: 2, kind: input, shape index: {}]
  %s3 = inlined_call_operand.hbm [shape: f32[2,128], index: 3, kind: output, shape index: {}]
  %s4 = sld [smem:[#allocation0]]
  $region30: #{tpu_custom_call.1} parent=0
    _
  %s6 = ssub.s32 1, %s4
  %s7 = scalar_select 0, %s6, %s4
  $region1: #{tpu_custom_call.1} parent=0
    #allocation2 [shape = 'u8[1024]{0}', space=vmem, size = 0x400, scoped, tag = 'input window, operand 0, single buffered']
    #allocation3 [shape = 's32[1]{0}', space=sflag, size = 0x4, scoped, tag = 'scoped memory for tpu_custom_call.1']
    #allocation4 [shape = 's32[1]{0}', space=sflag, size = 0x4, scoped, tag = 'scoped memory for tpu_custom_call.1']
    #allocation5 [shape = 'u8[16384]{0}', space=vmem, size = 0x4000, scoped, tag = 'input window, operand 1, single buffered']
    #allocation6 [shape = 's32[1]{0}', space=sflag, size = 0x4, scoped, tag = 'scoped memory for tpu_custom_call.1']
    #allocation7 [shape = 'u8[1024]{0}', space=vmem, size = 0x400, scoped, tag = 'output window, operand 0, single buffered']
    %8 = vsyncpa [#allocation3], 0
    %9 = vsyncpa [#allocation6], 0
    %10 = vsyncpa [#allocation4], 0
    // Predicated region
    $region2: #{tpu_custom_call.1} parent=1 // pred_check
      _
    $region3: #{tpu_custom_call.1} parent=1 // pred_check_branch
      %12 = sbr.rel (0) target = $region5
    $region4: #{tpu_custom_call.1} parent=1 // pred_region
      %14 = vsyncadd [#allocation3], 0
      %s16 = sshll.u32 %s0, 4
      %s17 = int_to_ptr.hbm [resolvable:$true] %s16
      %s18 = sshll.u32 [#allocation2], 4
      %s19 = int_to_ptr.vmem [resolvable:$true] %s18
      %21 = dma.hbm_to_vmem [thread:$0]  %s17, 32, %s19, [#allocation3]
    $region5: #{tpu_custom_call.1} parent=1 // pred_fallthru
      _
    // Predicated region
    $region6: #{tpu_custom_call.1} parent=1 // pred_check
      _
    $region7: #{tpu_custom_call.1} parent=1 // pred_check_branch
      %23 = sbr.rel (0) target = $region9
    $region8: #{tpu_custom_call.1} parent=1 // pred_region
      %25 = vsyncadd [#allocation6], 0
      %s26 = sshll.u32 %s1, 4
      %s27 = int_to_ptr.hbm [resolvable:$true] %s26
      %s28 = sshll.u32 [#allocation5], 4
      %s29 = int_to_ptr.vmem [resolvable:$true] %s28
      %34 = dma.hbm_to_vmem [thread:$0]  %s27, 512, %s29, [#allocation6], 128, 128, 8
    $region9: #{tpu_custom_call.1} parent=1 // pred_fallthru
      _
    // Predicated region
    $region10: #{tpu_custom_call.1} parent=1 // pred_check
      _
    $region11: #{tpu_custom_call.1} parent=1 // pred_check_branch
      %36 = sbr.rel (0) target = $region13
    $region12: #{tpu_custom_call.1} parent=1 // pred_region
      _
    $region13: #{tpu_custom_call.1} parent=1 // pred_fallthru
      _
    // Predicated region
    $region14: #{tpu_custom_call.1} parent=1 // pred_check
      _
    $region15: #{tpu_custom_call.1} parent=1 // pred_check_branch
      %38 = sbr.rel (0) target = $region17
    $region16: #{tpu_custom_call.1} parent=1 // pred_region
      %40 = dma.done [#allocation3], 32
    $region17: #{tpu_custom_call.1} parent=1 // pred_fallthru
      _
    // Predicated region
    $region18: #{tpu_custom_call.1} parent=1 // pred_check
      _
    $region19: #{tpu_custom_call.1} parent=1 // pred_check_branch
      %42 = sbr.rel (0) target = $region21
    $region20: #{tpu_custom_call.1} parent=1 // pred_region
      %44 = dma.done [#allocation6], 512
    $region21: #{tpu_custom_call.1} parent=1 // pred_fallthru
      _
    %v45 = vld [vmem:[#allocation2] sm:$0x3]
    %v46 = vld [vmem:[#allocation5] sm:$0xff]
    %v47 = vld [vmem:[#allocation5 + $0x8] sm:$0xff]
    %v48 = vld [vmem:[#allocation5 + $0x10] sm:$0xff]
    %v49 = vld [vmem:[#allocation5 + $0x18] sm:$0xff]
    %v50 = vld [vmem:[%s2] sm:$0x1]
    %v52 = vperm.slane %v50, 0
    %vm54 = vcmask 261120
    %v56 = vsel %vm54, %v45, 0
    %58 = vmatpush.msra.mxu0 0.0
    %59 = vmatpush.msra.mxu0 0.0
    %60 = vmatpush.msra.mxu0 0.0
    %61 = vmatpush.msra.mxu0 0.0
    %62 = vmatpush.msra.mxu0 0.0
    %63 = vmatpush.msra.mxu0 0.0
    %64 = vmatpush.msra.mxu0 0.0
    %65 = vmatpush.msra.mxu0 0.0
    %66 = vmatpush.msra.mxu0 0.0
    %67 = vmatpush.msra.mxu0 0.0
    %68 = vmatpush.msra.mxu0 0.0
    %69 = vmatpush.msra.mxu0 0.0
    %70 = vmatpush.msra.mxu0 %v49
    %71 = vmatpush.msra.mxu0 %v48
    %72 = vmatpush.msra.mxu0 %v47
    %73 = vmatpush.msra.mxu0 %v46
    %74 = vmatmul.f32.gmra.mxu0 %v56
    %v75 = vpop.f32.mrf.mxu0
    %v76 = vadd.f32 %v52, %v75
    %77 = vdwg.mxu0
    %78 = vst [vmem:[#allocation7] sm:$0x3] %v76
    // Predicated region
    $region22: #{tpu_custom_call.1} parent=1 // pred_check
      _
    $region23: #{tpu_custom_call.1} parent=1 // pred_check_branch
      %80 = sbr.rel (0) target = $region25
    $region24: #{tpu_custom_call.1} parent=1 // pred_region
      %82 = vsyncadd [#allocation4], 0
      %s84 = sshll.u32 [#allocation7], 4
      %s85 = int_to_ptr.vmem [resolvable:$true] %s84
      %s86 = sshll.u32 %s3, 4
      %s87 = int_to_ptr.hbm [resolvable:$true] %s86
      %89 = dma.vmem_to_hbm [thread:$0]  %s85, 32, %s87, [#allocation4]
    $region25: #{tpu_custom_call.1} parent=1 // pred_fallthru
      _
    // Predicated region
    $region26: #{tpu_custom_call.1} parent=1 // pred_check
      _
    $region27: #{tpu_custom_call.1} parent=1 // pred_check_branch
      %91 = sbr.rel (0) target = $region29
    $region28: #{tpu_custom_call.1} parent=1 // pred_region
      %93 = dma.done [#allocation4], 32
    $region29: #{tpu_custom_call.1} parent=1 // pred_fallthru
      _
    %94 = vsyncpa [#allocation3], 1
    %95 = vsyncpa [#allocation6], 1
    %96 = vsyncpa [#allocation4], 1

</llo_original>
